<compile_context>
chip_gen: v7x
topology: tpu7x:2x2x1
jax: 0.10.0
libtpu: 0.0.40
codegen_flags: <defaults>
</compile_context>

<pallas_src>
import functools

import jax
import jax.numpy as jnp
from jax import lax
from jax.experimental import pallas as pl
from jax.experimental.pallas import tpu as pltpu


def _shifted_activation(x, shifts, feats):
    """Apply the gMLP token shift to an (S, D) f32 tile (static shifts/feats)."""
    S, D = x.shape
    segments = len(shifts)
    if all(a == 0 for a in shifts):
        return x

    lane_aligned = (feats % 128 == 0) and (D % feats == 0)

    if lane_aligned:
        # Lane-aligned column bands: roll (XLU) + one row-mask select per band
        # that actually shifts; untouched / zero-shift / "rest" bands pass
        # through.  Restricts VPU work to 1/len(shifts) of the lanes.
        bands = []
        for j in range(D // feats):
            band = x[:, j * feats:(j + 1) * feats]
            if j < segments and shifts[j] != 0:
                a = shifts[j]
                rolled = pltpu.roll(band, shift=a % S, axis=0)
                row = lax.broadcasted_iota(jnp.int32, (S, feats), 0)
                valid = (row >= a) if a > 0 else (row < S + a)
                band = jnp.where(valid, rolled, jnp.zeros_like(rolled))
            bands.append(band)
        return jnp.concatenate(bands, axis=-1)

    # Unaligned small feats (e.g. D=32, feats=8): roll the whole tile per
    # nonzero shift (XLU slot, near-free) and select that segment's columns /
    # valid rows.  "rest" columns and zero-shift segments stay as x.
    col = lax.broadcasted_iota(jnp.int32, (S, D), 1)
    row = lax.broadcasted_iota(jnp.int32, (S, D), 0)
    out = x
    for j, a in enumerate(shifts):
        if a == 0:
            continue
        rolled = pltpu.roll(x, shift=a % S, axis=0)
        valid = (row >= a) if a > 0 else (row < S + a)
        rolled = jnp.where(valid, rolled, jnp.zeros_like(rolled))
        seg = (col >= j * feats) & (col < (j + 1) * feats)
        out = jnp.where(seg, rolled, out)
    return out


def _pre_shift_linear_kernel(x_ref, w_ref, b_ref, o_ref, *, shifts, feats):
    # x_ref: (S, D) f32 | w_ref: (D, tn) bf16 | b_ref: (1, tn) f32 | o_ref: (S, tn)
    x = x_ref[...]
    shifted = _shifted_activation(x, shifts, feats)
    # fn(x): Linear(D -> tn slice) on the MXU, bf16 operands, f32 accumulate.
    y = jnp.dot(shifted.astype(jnp.bfloat16), w_ref[...],
                preferred_element_type=jnp.float32)
    y = y + b_ref[...]          # (1, tn) broadcasts over rows
    o_ref[...] = y.astype(o_ref.dtype)


def pre_shift_tokens_linear(x, w, b, shifts):
    """x: (B, S, D) f32; w: (D, D) f32 (cast to bf16 internally); b: (1, D) f32."""
    B, S, D = x.shape
    shifts = tuple(shifts)
    segments = len(shifts)
    feats = D // segments
    assert all(abs(a) < S for a in shifts), "|shift| must be < seq length"

    # Output-feature tile: lane-dense (multiple of 128) divisor of D when D is
    # large, else the full feature dim (keeps w/out blocks VMEM-safe on v7x).
    tn = D
    if D % 128 == 0 and D > 512:
        for cand in (512, 256, 128):
            if D % cand == 0:
                tn = cand
                break
    n_tiles = D // tn

    w_bf16 = w.astype(jnp.bfloat16)
    kernel = functools.partial(_pre_shift_linear_kernel, shifts=shifts, feats=feats)

    # TODO(synk): for very long sequences on v7x, add an S-tile grid axis with
    # a max(|shift|)-row halo in the x BlockSpec; kept a single S block here
    # since the shift needs cross-tile rows and demo S is tiny.
    return pl.pallas_call(
        kernel,
        out_shape=jax.ShapeDtypeStruct((B, S, D), x.dtype),
        grid_spec=pltpu.PrefetchScalarGridSpec(
            num_scalar_prefetch=0,
            grid=(B, n_tiles),
            in_specs=[
                pl.BlockSpec((pl.Squeezed(), S, D), lambda i, n: (i, 0, 0)),
                pl.BlockSpec((D, tn), lambda i, n: (0, n)),
                pl.BlockSpec((1, tn), lambda i, n: (0, n)),
            ],
            out_specs=pl.BlockSpec((pl.Squeezed(), S, tn), lambda i, n: (i, 0, n)),
        ),
        compiler_params=pltpu.CompilerParams(
            dimension_semantics=("parallel", "parallel"),
            vmem_limit_bytes=32 * 1024 * 1024,
        ),
    )(x, w_bf16, b)


def _ref_pre_shift_tokens_linear(x, w_bf16, b, shifts):
    """Pure-JAX reference matching the PyTorch module with fn = Linear (bf16 matmul)."""
    shifts = tuple(shifts)
    if shifts == (0,):
        shifted = x
    else:
        segments = len(shifts)
        D = x.shape[-1]
        feats = D // segments
        chunks = [x[..., i:i + feats] for i in range(0, D, feats)]
        segs, rest = chunks[:segments], chunks[segments:]

        def sh(t, a):
            if a == 0:
                return t
            if a > 0:
                pad = jnp.zeros_like(t[:, :a, :])
                return jnp.concatenate([pad, t[:, : t.shape[1] - a, :]], axis=1)
            pad = jnp.zeros_like(t[:, :(-a), :])
            return jnp.concatenate([t[:, -a:, :], pad], axis=1)

        shifted = jnp.concatenate(
            [sh(t, a) for t, a in zip(segs, shifts)] + list(rest), axis=-1
        )
    y = jnp.dot(shifted.astype(jnp.bfloat16), w_bf16,
                preferred_element_type=jnp.float32)
    return y + b


if __name__ == "__main__":
    # Small shapes consistent with the module: batch=2, seq=8, dim=32,
    # shifts=(0, 1, -1, 2) -> 4 segments of 8 features each.
    B, S, D = 2, 8, 32
    shifts = (0, 1, -1, 2)

    key = jax.random.PRNGKey(0)
    kx, kw, kb = jax.random.split(key, 3)
    x = jax.random.normal(kx, (B, S, D), dtype=jnp.float32)
    # Deterministic parameters for fn = Linear(D, D).
    w = jax.random.normal(kw, (D, D), dtype=jnp.float32) * 0.05
    b = jax.random.normal(kb, (1, D), dtype=jnp.float32) * 0.1

    out = pre_shift_tokens_linear(x, w, b, shifts)
    out = jax.block_until_ready(out)

    ref = _ref_pre_shift_tokens_linear(x, w.astype(jnp.bfloat16), b, shifts)
    assert out.shape == (B, S, D)
    assert jnp.allclose(out, ref, atol=2e-3, rtol=2e-3), "mismatch vs reference"

    print("KERNEL_OK")
</pallas_src>

<mosaic_0001>
module attributes {stable_mosaic.version = 11 : i64} {
  func.func @_pre_shift_linear_kernel(%arg0: i32, %arg1: i32, %arg2: memref<1x8x32xf32, #tpu.memory_space<vmem>>, %arg3: memref<32x32xbf16, #tpu.memory_space<vmem>>, %arg4: memref<1x32xf32, #tpu.memory_space<vmem>>, %arg5: memref<1x8x32xf32, #tpu.memory_space<vmem>>) attributes {dimension_semantics = [#tpu.dimension_semantics<parallel>, #tpu.dimension_semantics<parallel>], iteration_bounds = array<i64: 2, 1>, scalar_prefetch = 0 : i64, scratch_operands = 0 : i64, tpu.core_type = #tpu.core_type<tc>, window_params = [{transform_indices = @transform_0, window_bounds = array<i64: 1, 8, 32>}, {transform_indices = @transform_1, window_bounds = array<i64: 32, 32>}, {transform_indices = @transform_2, window_bounds = array<i64: 1, 32>}, {transform_indices = @transform_3, window_bounds = array<i64: 1, 8, 32>}]} {
    %c0 = arith.constant 0 : index
    %c0_0 = arith.constant 0 : index
    %c0_1 = arith.constant 0 : index
    %0 = vector.load %arg2[%c0, %c0_0, %c0_1] : memref<1x8x32xf32, #tpu.memory_space<vmem>>, vector<1x8x32xf32>
    %1 = vector.shape_cast %0 : vector<1x8x32xf32> to vector<8x32xf32>
    %2 = tpu.iota {dimensions = array<i32: 1>} : vector<8x32xi32>
    %3 = tpu.iota {dimensions = array<i32: 0>} : vector<8x32xi32>
    %c1_i32 = arith.constant 1 : i32
    %4 = tpu.dynamic_rotate %1 by %c1_i32 dim 0 : vector<8x32xf32>, i32 -> vector<8x32xf32>
    %c1_i32_2 = arith.constant 1 : i32
    %5 = vector.broadcast %c1_i32_2 : i32 to vector<8x32xi32>
    %6 = arith.cmpi sge, %3, %5 : vector<8x32xi32>
    %cst = arith.constant 0.000000e+00 : f32
    %7 = vector.broadcast %cst : f32 to vector<8x32xf32>
    %8 = arith.select %6, %4, %7 : vector<8x32xi1>, vector<8x32xf32>
    %c8_i32 = arith.constant 8 : i32
    %9 = vector.broadcast %c8_i32 : i32 to vector<8x32xi32>
    %10 = arith.cmpi sge, %2, %9 : vector<8x32xi32>
    %c16_i32 = arith.constant 16 : i32
    %11 = vector.broadcast %c16_i32 : i32 to vector<8x32xi32>
    %12 = arith.cmpi slt, %2, %11 : vector<8x32xi32>
    %13 = arith.andi %10, %12 : vector<8x32xi1>
    %14 = arith.select %13, %8, %1 : vector<8x32xi1>, vector<8x32xf32>
    %c7_i32 = arith.constant 7 : i32
    %15 = tpu.dynamic_rotate %1 by %c7_i32 dim 0 : vector<8x32xf32>, i32 -> vector<8x32xf32>
    %c7_i32_3 = arith.constant 7 : i32
    %16 = vector.broadcast %c7_i32_3 : i32 to vector<8x32xi32>
    %17 = arith.cmpi slt, %3, %16 : vector<8x32xi32>
    %cst_4 = arith.constant 0.000000e+00 : f32
    %18 = vector.broadcast %cst_4 : f32 to vector<8x32xf32>
    %19 = arith.select %17, %15, %18 : vector<8x32xi1>, vector<8x32xf32>
    %c16_i32_5 = arith.constant 16 : i32
    %20 = vector.broadcast %c16_i32_5 : i32 to vector<8x32xi32>
    %21 = arith.cmpi sge, %2, %20 : vector<8x32xi32>
    %c24_i32 = arith.constant 24 : i32
    %22 = vector.broadcast %c24_i32 : i32 to vector<8x32xi32>
    %23 = arith.cmpi slt, %2, %22 : vector<8x32xi32>
    %24 = arith.andi %21, %23 : vector<8x32xi1>
    %25 = arith.select %24, %19, %14 : vector<8x32xi1>, vector<8x32xf32>
    %c2_i32 = arith.constant 2 : i32
    %26 = tpu.dynamic_rotate %1 by %c2_i32 dim 0 : vector<8x32xf32>, i32 -> vector<8x32xf32>
    %c2_i32_6 = arith.constant 2 : i32
    %27 = vector.broadcast %c2_i32_6 : i32 to vector<8x32xi32>
    %28 = arith.cmpi sge, %3, %27 : vector<8x32xi32>
    %cst_7 = arith.constant 0.000000e+00 : f32
    %29 = vector.broadcast %cst_7 : f32 to vector<8x32xf32>
    %30 = arith.select %28, %26, %29 : vector<8x32xi1>, vector<8x32xf32>
    %c24_i32_8 = arith.constant 24 : i32
    %31 = vector.broadcast %c24_i32_8 : i32 to vector<8x32xi32>
    %32 = arith.cmpi sge, %2, %31 : vector<8x32xi32>
    %c32_i32 = arith.constant 32 : i32
    %33 = vector.broadcast %c32_i32 : i32 to vector<8x32xi32>
    %34 = arith.cmpi slt, %2, %33 : vector<8x32xi32>
    %35 = arith.andi %32, %34 : vector<8x32xi1>
    %36 = arith.select %35, %30, %25 : vector<8x32xi1>, vector<8x32xf32>
    %37 = arith.truncf %36 : vector<8x32xf32> to vector<8x32xbf16>
    %c0_9 = arith.constant 0 : index
    %c0_10 = arith.constant 0 : index
    %38 = vector.load %arg3[%c0_9, %c0_10] : memref<32x32xbf16, #tpu.memory_space<vmem>>, vector<32x32xbf16>
    %cst_11 = arith.constant dense<0.000000e+00> : vector<8x32xf32>
    %39 = tpu.matmul %37, %38, %cst_11 {dimension_numbers = #tpu.dot_dimension_numbers<[1], [0], [0], [1], [0, 0, 1, 1], [], []>} : vector<8x32xbf16>, vector<32x32xbf16>, vector<8x32xf32> -> vector<8x32xf32>
    %c0_12 = arith.constant 0 : index
    %c0_13 = arith.constant 0 : index
    %40 = vector.load %arg4[%c0_12, %c0_13] : memref<1x32xf32, #tpu.memory_space<vmem>>, vector<1x32xf32>
    %41 = vector.broadcast %40 : vector<1x32xf32> to vector<8x32xf32>
    %42 = arith.addf %39, %41 : vector<8x32xf32>
    %c0_14 = arith.constant 0 : index
    %c0_15 = arith.constant 0 : index
    %c0_16 = arith.constant 0 : index
    %43 = vector.load %arg5[%c0_14, %c0_15, %c0_16] : memref<1x8x32xf32, #tpu.memory_space<vmem>>, vector<1x8x32xf32>
    %44 = vector.shape_cast %43 : vector<1x8x32xf32> to vector<8x32xf32>
    %45 = vector.shape_cast %42 : vector<8x32xf32> to vector<1x8x32xf32>
    tpu.vector_store %arg5[%c0_14, %c0_15, %c0_16], %45 {strides = array<i32>} : memref<1x8x32xf32, #tpu.memory_space<vmem>>, vector<1x8x32xf32>,
    return
  }
  func.func @transform_0(%arg0: i32, %arg1: i32) -> (i32, i32, i32) {
    %c0_i32 = arith.constant 0 : i32
    %c0_i32_0 = arith.constant 0 : i32
    %c0_i32_1 = arith.constant 0 : i32
    return %arg0, %c0_i32, %c0_i32_0 : i32, i32, i32
  }
  func.func @transform_1(%arg0: i32, %arg1: i32) -> (i32, i32) {
    %c0_i32 = arith.constant 0 : i32
    %c0_i32_0 = arith.constant 0 : i32
    return %c0_i32, %arg1 : i32, i32
  }
  func.func @transform_2(%arg0: i32, %arg1: i32) -> (i32, i32) {
    %c0_i32 = arith.constant 0 : i32
    %c0_i32_0 = arith.constant 0 : i32
    return %c0_i32, %arg1 : i32, i32
  }
  func.func @transform_3(%arg0: i32, %arg1: i32) -> (i32, i32, i32) {
    %c0_i32 = arith.constant 0 : i32
    %c0_i32_0 = arith.constant 0 : i32
    return %arg0, %c0_i32, %arg1 : i32, i32, i32
  }
}

</mosaic_0001>

<llo_original>
// kernel: tpu_custom_call.1
$region0: #{tpu_custom_call.1}
  #allocation0 [shape = 'u32[]', space=smem, size = 0x4, offset = 0x4, fixed_abs, tag = 'smem constant byte address 0x4 - core index']
  #allocation1 [shape = 'u32[144,128]{1,0:T(1,128)}', space=vmem, size = 0x12000, scoped, tag = 'internal scratch']
  %s0 = inlined_call_operand.hbm [shape: f32[2,8,32], index: 0, kind: input, shape index: {}]
  %s1 = inlined_call_operand.hbm [shape: bf16[32,32], index: 1, kind: input, shape index: {}]
  %s2 = inlined_call_operand.vmem [shape: f32[1,32], index: 2, kind: input, shape index: {}]
  %s3 = inlined_call_operand.hbm [shape: f32[2,8,32], index: 3, kind: output, shape index: {}]
  %s4 = sld [smem:[#allocation0]]
  $region53: #{tpu_custom_call.1} parent=0
    _
  %s6 = ssub.s32 1, %s4
  %s7 = scalar_select 0, %s6, %s4
  $region1: #{tpu_custom_call.1} parent=0
    #allocation2 [shape = 'u8[8192]{0}', space=vmem, size = 0x2000, scoped, tag = 'input window, operand 0']
    #allocation3 [shape = 's32[2]{0}', space=sflag, size = 0x8, scoped, tag = 'scoped memory for tpu_custom_call.1']
    #allocation4 [shape = 's32[2]{0}', space=sflag, size = 0x8, scoped, tag = 'scoped memory for tpu_custom_call.1']
    #allocation5 [shape = 'u8[8192]{0}', space=vmem, size = 0x2000, scoped, tag = 'input window, operand 1, single buffered']
    #allocation6 [shape = 's32[1]{0}', space=sflag, size = 0x4, scoped, tag = 'scoped memory for tpu_custom_call.1']
    #allocation7 [shape = 'u8[8192]{0}', space=vmem, size = 0x2000, scoped, tag = 'output window, operand 0']
    %8 = vsyncpa [#allocation3], 0
    %s9 = scalar_lea.sflag [#allocation3], 1
    %10 = vsyncpa %s9, 0
    %11 = vsyncpa [#allocation6], 0
    %12 = vsyncpa [#allocation4], 0
    %s13 = scalar_lea.sflag [#allocation4], 1
    %14 = vsyncpa %s13, 0
    loop: start=0, step=1, limit=4
    $region2: #{tpu_custom_call.1} parent=1 // loop_pre_header
      _
    $region3: #{tpu_custom_call.1} parent=1 // loop_header
      %s16 = sphi 0, %s20
      %p17 = scmp.ge.s32.totalorder %s16, 4
      %s23 = sphi 0, %s35
      %s24 = sphi 0, %s31
      %s25 = sphi 0, %s23
      %s26 = sphi 0, %s24
      %s27 = sphi 0, %s25
      %s28 = sphi 0, %s26
      %s38 = sphi 0, %s40
      %s41 = sphi 0, %s38
      %s42 = sphi 0, %s41
      %s58 = sphi 0, %s42
      %s64 = sphi 0, %s66
      %s67 = sphi 0, %s64
      %s68 = sphi 0, %s67
      %s84 = sphi 0, %s68
      %s90 = sphi 0, %s92
      %s93 = sphi 0, %s90
      %s94 = sphi 0, %s93
      %s110 = sphi 0, %s94
      %s118 = sphi 0, %s120
      %s121 = sphi 0, %s118
      %s122 = sphi 0, %s121
      %s138 = sphi 0, %s122
    $region4: #{tpu_custom_call.1} parent=1 // loop_header_branch
      %19 = sbr.rel (%p17) target = $region8
    $region5: #{tpu_custom_call.1} parent=1 // loop_body
      %s21 = ssub.s32 %s16, 1
      %s22 = ssub.s32 %s16, 2
      %s29 = sadd.s32 1, %s24
      %p30 = scmp.ge.s32.totalorder %s29, 1
      %s31 = scalar_select %p30, 0, %s29
      %s32 = sadd.s32 1, %s23
      %s33 = scalar_select %p30, %s32, %s23
      %p34 = scmp.ge.s32.totalorder %s33, 2
      %s35 = scalar_select %p34, 0, %s33
      %s36 = ssub.s32 %s23, %s35
      %p37 = scmp.eq.s32.totalorder %s36, 0
      %s39 = sadd.s32 %s38, 1
      %s40 = scalar_select %p37, %s38, %s39
      %p43 = pneg %p37
      %p44 = scmp.eq.s32.totalorder %s16, 1
      %p45 = por %p43, %p44
      %p46 = scmp.ne.s32.totalorder %s38, %s41
      %p47 = scmp.eq.s32.totalorder %s16, 0
      %p48 = por %p46, %p47
      %p49 = scmp.ne.s32.totalorder %s38, %s41
      %p50 = scmp.eq.s32.totalorder %s21, 1
      %p51 = por %p49, %p50
      %p52 = scmp.ne.s32.totalorder %s41, %s42
      %p53 = scmp.eq.s32.totalorder %s21, 0
      %p54 = por %p52, %p53
      %p55 = scmp.ne.s32.totalorder %s41, %s42
      %p56 = scmp.eq.s32.totalorder %s22, 1
      %p57 = por %p55, %p56
      %p59 = scmp.ne.s32.totalorder %s42, %s58
      %p60 = scmp.eq.s32.totalorder %s22, 0
      %p61 = por %p59, %p60
      %s62 = ssub.s32 %s24, %s31
      %p63 = scmp.eq.s32.totalorder %s62, 0
      %s65 = sadd.s32 %s64, 1
      %s66 = scalar_select %p63, %s64, %s65
      %p69 = pneg %p63
      %p70 = scmp.eq.s32.totalorder %s16, 1
      %p71 = por %p69, %p70
      %p72 = scmp.ne.s32.totalorder %s64, %s67
      %p73 = scmp.eq.s32.totalorder %s16, 0
      %p74 = por %p72, %p73
      %p75 = scmp.ne.s32.totalorder %s64, %s67
      %p76 = scmp.eq.s32.totalorder %s21, 1
      %p77 = por %p75, %p76
      %p78 = scmp.ne.s32.totalorder %s67, %s68
      %p79 = scmp.eq.s32.totalorder %s21, 0
      %p80 = por %p78, %p79
      %p81 = scmp.ne.s32.totalorder %s67, %s68
      %p82 = scmp.eq.s32.totalorder %s22, 1
      %p83 = por %p81, %p82
      %p85 = scmp.ne.s32.totalorder %s68, %s84
      %p86 = scmp.eq.s32.totalorder %s22, 0
      %p87 = por %p85, %p86
      %s88 = ssub.s32 %s24, %s31
      %p89 = scmp.eq.s32.totalorder %s88, 0
      %s91 = sadd.s32 %s90, 1
      %s92 = scalar_select %p89, %s90, %s91
      %p95 = pneg %p89
      %p96 = scmp.eq.s32.totalorder %s16, 1
      %p97 = por %p95, %p96
      %p98 = scmp.ne.s32.totalorder %s90, %s93
      %p99 = scmp.eq.s32.totalorder %s16, 0
      %p100 = por %p98, %p99
      %p101 = scmp.ne.s32.totalorder %s90, %s93
      %p102 = scmp.eq.s32.totalorder %s21, 1
      %p103 = por %p101, %p102
      %p104 = scmp.ne.s32.totalorder %s93, %s94
      %p105 = scmp.eq.s32.totalorder %s21, 0
      %p106 = por %p104, %p105
      %p107 = scmp.ne.s32.totalorder %s93, %s94
      %p108 = scmp.eq.s32.totalorder %s22, 1
      %p109 = por %p107, %p108
      %p111 = scmp.ne.s32.totalorder %s94, %s110
      %p112 = scmp.eq.s32.totalorder %s22, 0
      %p113 = por %p111, %p112
      %s114 = ssub.s32 %s23, %s35
      %s115 = ssub.s32 %s24, %s31
      %s116 = sor.u32 %s114, %s115
      %p117 = scmp.eq.s32.totalorder %s116, 0
      %s119 = sadd.s32 %s118, 1
      %s120 = scalar_select %p117, %s118, %s119
      %p123 = pneg %p117
      %p124 = scmp.eq.s32.totalorder %s16, 1
      %p125 = por %p123, %p124
      %p126 = scmp.ne.s32.totalorder %s118, %s121
      %p127 = scmp.eq.s32.totalorder %s16, 0
      %p128 = por %p126, %p127
      %p129 = scmp.ne.s32.totalorder %s118, %s121
      %p130 = scmp.eq.s32.totalorder %s21, 1
      %p131 = por %p129, %p130
      %p132 = scmp.ne.s32.totalorder %s121, %s122
      %p133 = scmp.eq.s32.totalorder %s21, 0
      %p134 = por %p132, %p133
      %p135 = scmp.ne.s32.totalorder %s121, %s122
      %p136 = scmp.eq.s32.totalorder %s22, 1
      %p137 = por %p135, %p136
      %p139 = scmp.ne.s32.totalorder %s122, %s138
      %p140 = scmp.eq.s32.totalorder %s22, 0
      %p141 = por %p139, %p140
      %p142 = scmp.le.s32.totalorder 1, %s16
      %p143 = scmp.lt.s32.totalorder %s16, 3
      %p144 = pnand %p142, %p143
      %p145 = pneg %p144
      // Predicated region
      $region9: #{tpu_custom_call.1} parent=5 // pred_check
        _
      $region10: #{tpu_custom_call.1} parent=5 // pred_check_branch
        %147 = sbr.rel (%p144) target = $region12
      $region11: #{tpu_custom_call.1} parent=5 // pred_region
        %s148 = ssub.s32 %s16, 1
        // Predicated region
        $region13: #{tpu_custom_call.1} parent=11 // pred_check
          %p149 = pneg %p80
        $region14: #{tpu_custom_call.1} parent=11 // pred_check_branch
          %151 = sbr.rel (%p149) target = $region16
        $region15: #{tpu_custom_call.1} parent=11 // pred_region
          %s153 = ssub.s32 256, 256
          %154 = vsyncadd [#allocation6], %s153
          %s155 = smul.addr %s26, 64
          %s156 = scalar_lea.hbm %s1, %s155
          %s157 = sshll.u32 [#allocation5], 4
          %s158 = int_to_ptr.vmem [resolvable:$true] %s157
          %163 = dma.hbm_to_vmem [thread:$0]  %s156, 256, %s158, [#allocation6], 64, 64, 4
        $region16: #{tpu_custom_call.1} parent=11 // pred_fallthru
          _
        // Predicated region
        $region17: #{tpu_custom_call.1} parent=11 // pred_check
          %p164 = pneg %p106
        $region18: #{tpu_custom_call.1} parent=11 // pred_check_branch
          %166 = sbr.rel (%p164) target = $region20
        $region19: #{tpu_custom_call.1} parent=11 // pred_region
          %p167 = scmp.lt.s32.totalorder %s26, 0
          %s168 = scalar_select %p167, %s26, 0
          %s169 = scalar_lea.vmem %s2, %s168
        $region20: #{tpu_custom_call.1} parent=11 // pred_fallthru
          _
      $region12: #{tpu_custom_call.1} parent=5 // pred_fallthru
        _
      %p170 = scmp.lt.s32.totalorder %s16, 2
      // Predicated region
      $region21: #{tpu_custom_call.1} parent=5 // pred_check
        %p171 = pneg %p170
      $region22: #{tpu_custom_call.1} parent=5 // pred_check_branch
        %173 = sbr.rel (%p171) target = $region24
      $region23: #{tpu_custom_call.1} parent=5 // pred_region
        // Predicated region
        $region25: #{tpu_custom_call.1} parent=23 // pred_check
          %p174 = pneg %p48
        $region26: #{tpu_custom_call.1} parent=23 // pred_check_branch
          %176 = sbr.rel (%p174) target = $region28
        $region27: #{tpu_custom_call.1} parent=23 // pred_region
          %s177 = sand.u32 %s38, 1
          %s178 = scalar_lea.sflag [#allocation3], %s177
          %s179 = sand.u32 %s38, 1
          %s180 = smul.addr %s179, 8
          %s181 = scalar_lea.vmem [#allocation2], %s180
          %s183 = ssub.s32 128, 128
          %184 = vsyncadd %s178, %s183
          %s185 = smul.addr %s23, 128
          %s186 = scalar_lea.hbm %s0, %s185
          %s188 = sshll.u32 %s181, 4
          %s189 = int_to_ptr.vmem [resolvable:$true] %s188
          %191 = dma.hbm_to_vmem [thread:$0]  %s186, 128, %s189, %s178
        $region28: #{tpu_custom_call.1} parent=23 // pred_fallthru
          _
      $region24: #{tpu_custom_call.1} parent=5 // pred_fallthru
        _
      %p192 = scmp.le.s32.totalorder 1, %s16
      %p193 = scmp.lt.s32.totalorder %s16, 3
      %p194 = pnand %p192, %p193
      %p195 = pneg %p194
      // Predicated region
      $region29: #{tpu_custom_call.1} parent=5 // pred_check
        _
      $region30: #{tpu_custom_call.1} parent=5 // pred_check_branch
        %197 = sbr.rel (%p194) target = $region32
      $region31: #{tpu_custom_call.1} parent=5 // pred_region
        %s198 = ssub.s32 %s16, 1
        %s199 = sand.u32 %s41, 1
        %s200 = scalar_lea.sflag [#allocation3], %s199
        %s201 = sand.u32 %s41, 1
        %s202 = smul.addr %s201, 8
        %s203 = scalar_lea.vmem [#allocation2], %s202
        // Predicated region
        $region33: #{tpu_custom_call.1} parent=31 // pred_check
          %p204 = pneg %p54
        $region34: #{tpu_custom_call.1} parent=31 // pred_check_branch
          %206 = sbr.rel (%p204) target = $region36
        $region35: #{tpu_custom_call.1} parent=31 // pred_region
          %207 = dma.done %s200, 128
        $region36: #{tpu_custom_call.1} parent=31 // pred_fallthru
          _
        // Predicated region
        $region37: #{tpu_custom_call.1} parent=31 // pred_check
          %p208 = pneg %p80
        $region38: #{tpu_custom_call.1} parent=31 // pred_check_branch
          %210 = sbr.rel (%p208) target = $region40
        $region39: #{tpu_custom_call.1} parent=31 // pred_region
          %211 = dma.done [#allocation6], 256
        $region40: #{tpu_custom_call.1} parent=31 // pred_fallthru
          _
        %s212 = sand.u32 %s41, 1
        %s213 = scalar_lea.sflag [#allocation3], %s212
        %s214 = sand.u32 %s41, 1
        %s215 = smul.addr %s214, 8
        %s216 = scalar_lea.vmem [#allocation2], %s215
        %p217 = pneg %p54
        %p218 = pneg %p51
        %p219 = pneg %p80
        %p220 = pneg %p77
        %p221 = scmp.lt.s32.totalorder %s26, 0
        %s222 = scalar_select %p221, %s26, 0
        %s223 = scalar_lea.vmem %s2, %s222
        %p224 = pneg %p106
        %p225 = pneg %p103
        %p226 = pneg %p134
        %p227 = pneg %p131
        %s228 = sand.u32 %s121, 1
        %s229 = scalar_lea.sflag [#allocation4], %s228
        %s230 = sand.u32 %s121, 1
        %s231 = smul.addr %s230, 8
        %s232 = scalar_lea.vmem [#allocation7], %s231
        %p233 = scmp.lt.s32.totalorder %s26, 0
        %s234 = scalar_select %p233, %s26, 0
        %s235 = scalar_lea.vmem %s2, %s234
        %v237 = vld [vmem:[%s203] sm:$0xff]
        %v238 = vlaneseq
        %v239 = vand.u32 %v238, 127
        %v240 = vlaneseq
        %v241 = vshrl.u32 %v240, 7
        %v242 = vrot.slane %v237, 7
        %vm243 = vcmp.ge.s32.totalorder %v241, 1
        %v244 = vsel %vm243, %v242, 0.0
        %vm245 = vcmp.ge.s32.totalorder %v239, 8
        %vm246 = vcmp.lt.s32.totalorder %v239, 16
        %vm247 = vmand %vm245, %vm246
        %v248 = vsel %vm247, %v244, %v237
        %v249 = vrot.slane %v237, 1
        %vm250 = vcmp.lt.s32.totalorder %v241, 7
        %v251 = vsel %vm250, %v249, 0.0
        %vm252 = vcmp.ge.s32.totalorder %v239, 16
        %vm253 = vcmp.lt.s32.totalorder %v239, 24
        %vm254 = vmand %vm252, %vm253
        %v255 = vsel %vm254, %v251, %v248
        %v256 = vrot.slane %v237, 6
        %vm257 = vcmp.ge.s32.totalorder %v241, 2
        %v258 = vsel %vm257, %v256, 0.0
        %vm259 = vcmp.ge.s32.totalorder %v239, 24
        %vm260 = vcmp.lt.s32.totalorder %v239, 32
        %vm261 = vmand %vm259, %vm260
        %v262 = vsel %vm261, %v258, %v255
        %v263 = vpack.c.bf16 %v262, %v262
        %v264 = vld [vmem:[#allocation5] sm:$0xf]
        %v265 = vld [vmem:[#allocation5 + $0x4] sm:$0xf]
        %v266 = vld [vmem:[#allocation5 + $0x8] sm:$0xf]
        %v267 = vld [vmem:[#allocation5 + $0xc] sm:$0xf]
        %v268 = vld [vmem:[%s235] sm:$0x1]
        %v270 = vlaneseq
        %v271 = vshrl.u32 %v270, 7
        %v272 = vsub.s32 0, %v271
        %v273 = vrot.slane %v268, %v272
        %v279 = vunpack.c.l.b16 %v264
        %v280 = vunpack.c.l.b16 %v265
        %v281 = vunpack.c.l.b16 %v266
        %v282 = vunpack.c.l.b16 %v267
        %v283 = vpack.c.b16 %v280, %v279
        %v284 = vpack.c.b16 %v282, %v281
        %vm287 = vcmask 261120
        %v289 = vsel %vm287, %v263, 0
        %291 = vmatprep.subr.bf16.mxu0 0
        %292 = vmatpush1.bf16.msra.mxu0 %v283
        %293 = vmatprep.subr.bf16.mxu0 0
        %294 = vmatpush1.bf16.msra.mxu0 %v284
        %295 = vmatprep.subr.bf16.mxu0 0
        %296 = vmatpush1.bf16.msra.mxu0 0
        %297 = vmatprep.subr.bf16.mxu0 0
        %298 = vmatpush1.bf16.msra.mxu0 0
        %299 = vmatprep.subr.bf16.mxu0 0
        %300 = vmatpush1.bf16.msra.mxu0 0
        %301 = vmatprep.subr.bf16.mxu0 0
        %302 = vmatpush1.bf16.msra.mxu0 0
        %303 = vmatprep.subr.bf16.mxu0 0
        %304 = vmatpush1.bf16.msra.mxu0 0
        %305 = vmatprep.subr.bf16.mxu0 0
        %306 = vmatpush1.bf16.msra.mxu0 0
        %307 = vmatprep.subr.bf16.mxu0 0
        %308 = vmatpush1.bf16.msra.mxu0 0
        %309 = vmatprep.subr.bf16.mxu0 0
        %310 = vmatpush1.bf16.msra.mxu0 0
        %311 = vmatprep.subr.bf16.mxu0 0
        %312 = vmatpush1.bf16.msra.mxu0 0
        %313 = vmatprep.subr.bf16.mxu0 0
        %314 = vmatpush1.bf16.msra.mxu0 0
        %315 = vmatprep.subr.bf16.mxu0 0
        %316 = vmatpush1.bf16.msra.mxu0 0
        %317 = vmatprep.subr.bf16.mxu0 0
        %318 = vmatpush1.bf16.msra.mxu0 0
        %319 = vmatprep.subr.bf16.mxu0 0
        %320 = vmatpush1.bf16.msra.mxu0 0
        %321 = vmatprep.subr.bf16.mxu0 0
        %322 = vmatpush1.bf16.msra.mxu0 0
        %323 = vmatprep.mubr.bf16.mxu0 0
        %324 = vmatmul.mubr.bf16.gmra.mrb[0].mxu0 %v289
        %v325 = vpop.f32.mrb[0].mxu0
        %v326 = vadd.f32 %v273, %v325
        %v327 = vpop.f32.mrb[0].mxu0
        %v328 = vpop.f32.mrb[0].mxu0
        %v329 = vpop.f32.mrb[0].mxu0
        %330 = vdwg.mxu0
        %331 = vst.msk [vmem:[%s232] sm:$0xff] %vm287, %v326
        %s332 = sand.u32 %s121, 1
        %s333 = scalar_lea.sflag [#allocation4], %s332
        %s334 = sand.u32 %s121, 1
        %s335 = smul.addr %s334, 8
        %s336 = scalar_lea.vmem [#allocation7], %s335
        // Predicated region
        $region41: #{tpu_custom_call.1} parent=31 // pred_check
          %p337 = pneg %p131
        $region42: #{tpu_custom_call.1} parent=31 // pred_check_branch
          %339 = sbr.rel (%p337) target = $region44
        $region43: #{tpu_custom_call.1} parent=31 // pred_region
          %s341 = ssub.s32 128, 128
          %342 = vsyncadd %s333, %s341
          %s343 = sadd.s32 %s26, %s25
          %s344 = smul.addr %s343, 128
          %s345 = scalar_lea.hbm %s3, %s344
          %s347 = sshll.u32 %s336, 4
          %s348 = int_to_ptr.vmem [resolvable:$true] %s347
          %350 = dma.vmem_to_hbm [thread:$0]  %s348, 128, %s345, %s333
        $region44: #{tpu_custom_call.1} parent=31 // pred_fallthru
          _
      $region32: #{tpu_custom_call.1} parent=5 // pred_fallthru
        _
      %p351 = scmp.le.s32.totalorder 2, %s16
      // Predicated region
      $region45: #{tpu_custom_call.1} parent=5 // pred_check
        %p352 = pneg %p351
      $region46: #{tpu_custom_call.1} parent=5 // pred_check_branch
        %354 = sbr.rel (%p352) target = $region48
      $region47: #{tpu_custom_call.1} parent=5 // pred_region
        %s355 = ssub.s32 %s16, 2
        // Predicated region
        $region49: #{tpu_custom_call.1} parent=47 // pred_check
          %p356 = pneg %p137
        $region50: #{tpu_custom_call.1} parent=47 // pred_check_branch
          %358 = sbr.rel (%p356) target = $region52
        $region51: #{tpu_custom_call.1} parent=47 // pred_region
          %s359 = sand.u32 %s122, 1
          %s360 = scalar_lea.sflag [#allocation4], %s359
          %s361 = sand.u32 %s122, 1
          %s362 = smul.addr %s361, 8
          %s363 = scalar_lea.vmem [#allocation7], %s362
          %364 = dma.done %s360, 128
        $region52: #{tpu_custom_call.1} parent=47 // pred_fallthru
          _
      $region48: #{tpu_custom_call.1} parent=5 // pred_fallthru
        _
    $region6: #{tpu_custom_call.1} parent=1 // loop_footer
      %s20 = sadd.s32 1, %s16
    $region7: #{tpu_custom_call.1} parent=1 // loop_footer_branch
      %15 = sbr.rel target = $region3
    $region8: #{tpu_custom_call.1} parent=1 // loop_exit
      _
    %365 = vsyncpa [#allocation3], 1
    %s366 = scalar_lea.sflag [#allocation3], 1
    %367 = vsyncpa %s366, 1
    %368 = vsyncpa [#allocation6], 1
    %369 = vsyncpa [#allocation4], 1
    %s370 = scalar_lea.sflag [#allocation4], 1
    %371 = vsyncpa %s370, 1

</llo_original>
